<compile_context>
chip_gen: v6e
topology: v6e:2x2x1
jax: 0.10.0
libtpu: 0.0.40
codegen_flags: <defaults>
</compile_context>

<pallas_src>
import jax
import jax.numpy as jnp
from jax.experimental import pallas as pl
from jax.experimental.pallas import tpu as pltpu


_TARGET_TILE_BYTES = 4 << 20    # ~4 MiB blocks -> ~16 MiB live with double buffering
_MIN_TILE_BYTES = 512 << 10     # don't shrink below this when adding grid steps
_VMEM_LIMIT_BYTES = 32 << 20    # safe on v5e/v6e (128 MiB phys) and v7x (64 MiB phys)


def _normalize_kernel(x_ref, scale_ref, bias_ref, o_ref):
    # x_ref:     (TR, TL) tile of the flattened image
    # scale_ref: (TR, 1)  per-row 1/std
    # bias_ref:  (TR, 1)  per-row -mean/std
    x = x_ref[...].astype(jnp.float32)
    o_ref[...] = (x * scale_ref[...] + bias_ref[...]).astype(o_ref.dtype)


def _sublane_quantum(in_dtype, out_dtype):
    """Packed min-tile sublane count: 8 for 4B, 16 for 2B, 32 for 1B dtypes."""
    nbytes = min(jnp.dtype(in_dtype).itemsize, jnp.dtype(out_dtype).itemsize)
    nbytes = max(1, min(4, nbytes))
    return 32 // nbytes


def _divisors(n):
    ds = []
    d = 1
    while d * d <= n:
        if n % d == 0:
            ds.append(d)
            if d != n // d:
                ds.append(n // d)
        d += 1
    return sorted(ds)


def _choose_split(rows, cols, row_q):
    """Smallest s with s | cols, (cols//s) % 128 == 0 and (rows*s) % row_q == 0."""
    for s in _divisors(cols):
        if (cols // s) % 128 == 0 and (rows * s) % row_q == 0:
            return s
    return None


def _largest_tile(dim, quantum, cap):
    """Largest divisor of `dim` that is a multiple of `quantum` and <= cap.

    Assumes dim % quantum == 0."""
    cap = max(quantum, min(cap, dim))
    best = quantum
    t = quantum
    while t <= cap:
        if dim % t == 0:
            best = t
        t += quantum
    return best


def _choose_blocks(rows, cols, row_q, elem_bytes):
    """Pick (row_tile, lane_tile) targeting ~_TARGET_TILE_BYTES per block with
    >= 2 grid steps (megacore) and >= 4 while tiles stay comfortably sized."""
    target_elems = max(1, _TARGET_TILE_BYTES // elem_bytes)
    rows_tileable = rows % row_q == 0
    cols_tileable = cols % 128 == 0

    if cols_tileable:
        base_r = row_q if rows_tileable else rows
        tl = _largest_tile(cols, 128, max(128, target_elems // max(base_r, 1)))
    else:
        tl = cols                      # must take the full (masked) lane axis
    if rows_tileable:
        tr = _largest_tile(rows, row_q, max(row_q, target_elems // max(tl, 1)))
    else:
        tr = rows                      # row axis taken whole

    while True:
        nsteps = (rows // tr) * (cols // tl)
        if nsteps >= 4:
            break
        if nsteps >= 2 and tr * tl * elem_bytes < 2 * _MIN_TILE_BYTES:
            break
        shrunk = False
        if cols_tileable and tl > 128:
            new_tl = _largest_tile(cols, 128, tl // 2)
            if new_tl < tl:
                tl, shrunk = new_tl, True
        if not shrunk and rows_tileable and tr > row_q:
            new_tr = _largest_tile(rows, row_q, tr // 2)
            if new_tr < tr:
                tr, shrunk = new_tr, True
        if not shrunk:
            break
    return tr, tl


def normalize_pallas(image, mean, std):
    """image: [N, C, H, W]; mean/std: [C]. Returns normalized image."""
    N, C, H, W = image.shape
    out_dtype = image.dtype if jnp.issubdtype(image.dtype, jnp.floating) else jnp.float32

    mean = jnp.asarray(mean, dtype=jnp.float32).reshape(C)
    std = jnp.asarray(std, dtype=jnp.float32).reshape(C)
    scale = 1.0 / std                  # out = x * scale + bias
    bias = -mean * scale               # std == 0 -> inf/nan, same as PyTorch

    R0, L0 = N * C, H * W
    row_q = _sublane_quantum(image.dtype, out_dtype)

    # Lane-dense flat view (N*C*s, (H*W)//s); the reshape of contiguous NCHW
    # is free, and s restores sublane alignment for small N*C while keeping
    # the lane axis a multiple of 128.
    s = _choose_split(R0, L0, row_q)
    if s is None:
        s = 1  # fallback: correctness first (full-extent blocks on the misaligned dims)
        # TODO(synk): pad the lane axis for images whose H*W has no 128-aligned
        # factorization (e.g. 100x100); those run with masked partial stores.
    R, L = R0 * s, L0 // s

    x2d = image.reshape(R, L)
    # Row r of the flat view belongs to channel (r // s) % C.
    scale_rows = jnp.tile(jnp.repeat(scale, s), N).reshape(R, 1)
    bias_rows = jnp.tile(jnp.repeat(bias, s), N).reshape(R, 1)

    in_bytes = jnp.dtype(image.dtype).itemsize
    out_bytes = jnp.dtype(out_dtype).itemsize
    tr, tl = _choose_blocks(R, L, row_q, max(in_bytes, out_bytes))
    grid = (R // tr, L // tl)

    out2d = pl.pallas_call(
        _normalize_kernel,
        out_shape=jax.ShapeDtypeStruct((R, L), out_dtype),
        grid=grid,
        in_specs=[
            pl.BlockSpec((tr, tl), lambda i, j: (i, j)),   # image tile
            pl.BlockSpec((tr, 1), lambda i, j: (i, 0)),    # per-row scale
            pl.BlockSpec((tr, 1), lambda i, j: (i, 0)),    # per-row bias
        ],
        out_specs=pl.BlockSpec((tr, tl), lambda i, j: (i, j)),
        compiler_params=pltpu.CompilerParams(
            dimension_semantics=("parallel", "parallel"),
            vmem_limit_bytes=_VMEM_LIMIT_BYTES,
        ),
        cost_estimate=pl.CostEstimate(
            flops=2 * R * L,
            transcendentals=0,
            bytes_accessed=R * L * (in_bytes + out_bytes) + 2 * R * 4,
        ),
    )(x2d, scale_rows, bias_rows)
    return out2d.reshape(N, C, H, W)


_normalize_pallas_jit = jax.jit(normalize_pallas)


class NormalizePallas:
    """Mirror of the PyTorch `Normalize` module (forward semantics)."""

    def __init__(self, mean=(0.485, 0.456, 0.406), std=(0.229, 0.224, 0.225)):
        self.mean = jnp.asarray(mean, dtype=jnp.float32)
        self.std = jnp.asarray(std, dtype=jnp.float32)

    def __call__(self, image, target=None):
        image = _normalize_pallas_jit(image, self.mean, self.std)
        return (image, target)


if __name__ == "__main__":
    key = jax.random.PRNGKey(0)
    module = NormalizePallas()
    C = 3
    mean_b = module.mean.reshape(1, C, 1, 1)
    std_b = module.std.reshape(1, C, 1, 1)

    k1, k2 = jax.random.split(key)

    # Case 1: aligned path (split factor s=4 -> (24, 256) lane-dense view).
    img1 = jax.random.uniform(k1, (2, C, 32, 32), dtype=jnp.float32)
    out1, tgt1 = module(img1, target=None)
    out1 = jax.block_until_ready(out1)
    ref1 = (img1 - mean_b) / std_b
    assert out1.shape == img1.shape and out1.dtype == img1.dtype
    assert jnp.allclose(out1, ref1, atol=1e-5, rtol=1e-5)
    assert tgt1 is None

    # Case 2: fallback path (N*C=6 full rows, lane axis tiled to 128).
    img2 = jax.random.uniform(k2, (2, C, 16, 16), dtype=jnp.float32)
    out2, _ = module(img2, target=None)
    out2 = jax.block_until_ready(out2)
    ref2 = (img2 - mean_b) / std_b
    assert out2.shape == img2.shape and out2.dtype == img2.dtype
    assert jnp.allclose(out2, ref2, atol=1e-5, rtol=1e-5)

    print("KERNEL_OK")
</pallas_src>

<mosaic_0001>
module attributes {stable_mosaic.version = 11 : i64} {
  func.func @_normalize_kernel(%arg0: i32, %arg1: i32, %arg2: memref<24x128xf32, #tpu.memory_space<vmem>>, %arg3: memref<24x1xf32, #tpu.memory_space<vmem>>, %arg4: memref<24x1xf32, #tpu.memory_space<vmem>>, %arg5: memref<24x128xf32, #tpu.memory_space<vmem>>) attributes {dimension_semantics = [#tpu.dimension_semantics<parallel>, #tpu.dimension_semantics<parallel>], iteration_bounds = array<i64: 1, 2>, scalar_prefetch = 0 : i64, scratch_operands = 0 : i64, tpu.core_type = #tpu.core_type<tc>, window_params = [{transform_indices = @transform_0, window_bounds = array<i64: 24, 128>}, {transform_indices = @transform_1, window_bounds = array<i64: 24, 1>}, {transform_indices = @transform_2, window_bounds = array<i64: 24, 1>}, {transform_indices = @transform_3, window_bounds = array<i64: 24, 128>}]} {
    %c0 = arith.constant 0 : index
    %c0_0 = arith.constant 0 : index
    %0 = vector.load %arg2[%c0, %c0_0] : memref<24x128xf32, #tpu.memory_space<vmem>>, vector<24x128xf32>
    %c0_1 = arith.constant 0 : index
    %c0_2 = arith.constant 0 : index
    %1 = vector.load %arg3[%c0_1, %c0_2] : memref<24x1xf32, #tpu.memory_space<vmem>>, vector<24x1xf32>
    %2 = vector.broadcast %1 : vector<24x1xf32> to vector<24x128xf32>
    %3 = arith.mulf %0, %2 : vector<24x128xf32>
    %c0_3 = arith.constant 0 : index
    %c0_4 = arith.constant 0 : index
    %4 = vector.load %arg4[%c0_3, %c0_4] : memref<24x1xf32, #tpu.memory_space<vmem>>, vector<24x1xf32>
    %5 = vector.broadcast %4 : vector<24x1xf32> to vector<24x128xf32>
    %6 = arith.addf %3, %5 : vector<24x128xf32>
    %c0_5 = arith.constant 0 : index
    %c0_6 = arith.constant 0 : index
    %7 = vector.load %arg5[%c0_5, %c0_6] : memref<24x128xf32, #tpu.memory_space<vmem>>, vector<24x128xf32>
    tpu.vector_store %arg5[%c0_5, %c0_6], %6 {strides = array<i32>} : memref<24x128xf32, #tpu.memory_space<vmem>>, vector<24x128xf32>,
    return
  }
  func.func @transform_0(%arg0: i32, %arg1: i32) -> (i32, i32) {
    %c0_i32 = arith.constant 0 : i32
    return %arg0, %arg1 : i32, i32
  }
  func.func @transform_1(%arg0: i32, %arg1: i32) -> (i32, i32) {
    %c0_i32 = arith.constant 0 : i32
    %c0_i32_0 = arith.constant 0 : i32
    return %arg0, %c0_i32 : i32, i32
  }
  func.func @transform_2(%arg0: i32, %arg1: i32) -> (i32, i32) {
    %c0_i32 = arith.constant 0 : i32
    %c0_i32_0 = arith.constant 0 : i32
    return %arg0, %c0_i32 : i32, i32
  }
  func.func @transform_3(%arg0: i32, %arg1: i32) -> (i32, i32) {
    %c0_i32 = arith.constant 0 : i32
    return %arg0, %arg1 : i32, i32
  }
}

</mosaic_0001>

<llo_original>
// kernel: tile.14
$region0: #{tile.14}
  #allocation0 [shape = 's32[1]{0}', space=sflag, size = 0x4, scoped, tag = 'scoped memory for tile.14']
  %s0 = inlined_call_operand.vmem [shape: f32[12], index: 0, kind: input, shape index: {}]
  %s1 = inlined_call_operand.vmem [shape: f32[2,12], index: 1, kind: output, shape index: {}]
  // Predicated region
  $region2: #{tile.14} parent=0 // pred_check
    _
  $region3: #{tile.14} parent=0 // pred_check_branch
    %3 = sbr.rel (0) target = $region5
  $region4: #{tile.14} parent=0 // pred_region
    _
  $region5: #{tile.14} parent=0 // pred_fallthru
    _
  %v4 = vld [vmem:[%s0] ss:$0 sm:$0xff]
  %5 = vst [vmem:[%s1] sm:$0x3] %v4

// kernel: tile.13
$region0: #{tile.13}
  %s0 = inlined_call_operand.vmem [shape: f32[3,4], index: 0, kind: input, shape index: {}]
  %s1 = inlined_call_operand.vmem [shape: f32[12], index: 1, kind: output, shape index: {}]
  $region1: #{tile.13} parent=0
    #allocation0 [shape = 'u8[4096]{0}', space=vmem, size = 0x1000, scoped, tag = 'scoped mem for output reshape']
    #allocation1 [shape = 'u8[4096]{0}', space=vmem, size = 0x1000, scoped, tag = 'scoped mem for input reshape']
    %s3 = sshll.u32 1, 4
    %s4 = ssub.s32 %s3, 1
    %v5 = vld [vmem:[%s0] sm:%s4]
    %6 = vst [vmem:[#allocation1] sm:%s4] %v5
    %v7 = vld [vmem:[#allocation1] sm:$0x1]
    %vm8 = vcmask 31744
    %9 = vst.msk [vmem:[#allocation0] sm:$0x1] %vm8, %v7
    %s10 = scalar_lea.vmem [#allocation1], 2
    %v11 = vld [vmem:[%s10] sm:$0x1]
    %12 = vrot.lane.b32.xlu0 %v11, 8
    %v13 = vpop.permute.xlu0 %12
    %vm14 = vcmask 97344
    %15 = vst.msk [vmem:[#allocation0] sm:$0x1] %vm14, %v13
    %s16 = scalar_lea.vmem [#allocation1], 1
    %v17 = vld [vmem:[%s16] sm:$0x1]
    %18 = vrot.lane.b32.xlu0 %v17, 4
    %v19 = vpop.permute.xlu0 %18
    %vm20 = vcmask 64544
    %21 = vst.msk [vmem:[#allocation0] sm:$0x1] %vm20, %v19
    %s23 = sshll.u32 1, 1
    %s24 = ssub.s32 %s23, 1
    %v26 = vld [vmem:[#allocation0] sm:%s24]
    %s27 = sshll.u32 1, 1
    %s28 = ssub.s32 %s27, 1
    %29 = vst [vmem:[%s1] sm:%s28] %v26

// kernel: tile.0
$region0: #{tile.0}
  %s0 = inlined_call_operand.vmem [shape: f32[2,12], index: 0, kind: input, shape index: {}]
  %s1 = inlined_call_operand.vmem [shape: f32[24,1], index: 1, kind: output, shape index: {}]
  $region1: #{tile.0} parent=0
    #allocation0 [shape = 'u8[4096]{0}', space=vmem, size = 0x1000, scoped, tag = 'scoped mem for input reshape']
    %s3 = sshll.u32 1, 2
    %s4 = ssub.s32 %s3, 1
    %v5 = vld [vmem:[%s0] sm:%s4]
    %6 = vst [vmem:[#allocation0] sm:%s4] %v5
    %v7 = vld [vmem:[#allocation0] sm:$0x3]
    %vm8 = vcmask 7168
    %9 = vst.msk [vmem:[%s1] ss:$12 sm:$0x3] %vm8, %v7
    %v10 = vld [vmem:[#allocation0] sm:$0x3]
    %11 = vrot.lane.b32.xlu0 %v10, 127
    %v12 = vpop.permute.xlu0 %11
    %vm13 = vcmask 7168
    %s14 = scalar_lea.vmem %s1, 1
    %15 = vst.msk [vmem:[%s14] ss:$12 sm:$0x3] %vm13, %v12
    %v16 = vld [vmem:[#allocation0] sm:$0x3]
    %17 = vrot.lane.b32.xlu0 %v16, 126
    %v18 = vpop.permute.xlu0 %17
    %vm19 = vcmask 7168
    %s20 = scalar_lea.vmem %s1, 2
    %21 = vst.msk [vmem:[%s20] ss:$12 sm:$0x3] %vm19, %v18
    %v22 = vld [vmem:[#allocation0] sm:$0x3]
    %23 = vrot.lane.b32.xlu0 %v22, 125
    %v24 = vpop.permute.xlu0 %23
    %vm25 = vcmask 7168
    %s26 = scalar_lea.vmem %s1, 3
    %27 = vst.msk [vmem:[%s26] ss:$12 sm:$0x3] %vm25, %v24
    %v28 = vld [vmem:[#allocation0] sm:$0x3]
    %29 = vrot.lane.b32.xlu0 %v28, 124
    %v30 = vpop.permute.xlu0 %29
    %vm31 = vcmask 7168
    %s32 = scalar_lea.vmem %s1, 4
    %33 = vst.msk [vmem:[%s32] ss:$12 sm:$0x3] %vm31, %v30
    %v34 = vld [vmem:[#allocation0] sm:$0x3]
    %35 = vrot.lane.b32.xlu0 %v34, 123
    %v36 = vpop.permute.xlu0 %35
    %vm37 = vcmask 7168
    %s38 = scalar_lea.vmem %s1, 5
    %39 = vst.msk [vmem:[%s38] ss:$12 sm:$0x3] %vm37, %v36
    %v40 = vld [vmem:[#allocation0] sm:$0x3]
    %41 = vrot.lane.b32.xlu0 %v40, 122
    %v42 = vpop.permute.xlu0 %41
    %vm43 = vcmask 7168
    %s44 = scalar_lea.vmem %s1, 6
    %45 = vst.msk [vmem:[%s44] ss:$12 sm:$0x3] %vm43, %v42
    %v46 = vld [vmem:[#allocation0] sm:$0x3]
    %47 = vrot.lane.b32.xlu0 %v46, 121
    %v48 = vpop.permute.xlu0 %47
    %vm49 = vcmask 7168
    %s50 = scalar_lea.vmem %s1, 7
    %51 = vst.msk [vmem:[%s50] ss:$12 sm:$0x3] %vm49, %v48
    %v52 = vld [vmem:[#allocation0] sm:$0x3]
    %53 = vrot.lane.b32.xlu0 %v52, 120
    %v54 = vpop.permute.xlu0 %53
    %vm55 = vcmask 7168
    %s56 = scalar_lea.vmem %s1, 8
    %57 = vst.msk [vmem:[%s56] ss:$12 sm:$0x3] %vm55, %v54
    %v58 = vld [vmem:[#allocation0] sm:$0x3]
    %59 = vrot.lane.b32.xlu0 %v58, 119
    %v60 = vpop.permute.xlu0 %59
    %vm61 = vcmask 7168
    %s62 = scalar_lea.vmem %s1, 9
    %63 = vst.msk [vmem:[%s62] ss:$12 sm:$0x3] %vm61, %v60
    %v64 = vld [vmem:[#allocation0] sm:$0x3]
    %65 = vrot.lane.b32.xlu0 %v64, 118
    %v66 = vpop.permute.xlu0 %65
    %vm67 = vcmask 7168
    %s68 = scalar_lea.vmem %s1, 10
    %69 = vst.msk [vmem:[%s68] ss:$12 sm:$0x3] %vm67, %v66
    %v70 = vld [vmem:[#allocation0] sm:$0x3]
    %71 = vrot.lane.b32.xlu0 %v70, 117
    %v72 = vpop.permute.xlu0 %71
    %vm73 = vcmask 7168
    %s74 = scalar_lea.vmem %s1, 11
    %75 = vst.msk [vmem:[%s74] ss:$12 sm:$0x3] %vm73, %v72

// kernel: normalize_pallas.1
$region0: #{normalize_pallas.1}
  #allocation0 [shape = 'u32[]', space=smem, size = 0x4, offset = 0x4, fixed_abs, tag = 'smem constant byte address 0x4 - core index']
  #allocation1 [shape = 'u32[144,128]{1,0:T(1,128)}', space=vmem, size = 0x12000, scoped, tag = 'internal scratch']
  %s0 = inlined_call_operand.vmem [shape: f32[24,256], index: 0, kind: input, shape index: {}]
  %s1 = inlined_call_operand.vmem [shape: f32[24,1], index: 1, kind: input, shape index: {}]
  %s2 = inlined_call_operand.vmem [shape: f32[24,1], index: 2, kind: input, shape index: {}]
  %s3 = inlined_call_operand.vmem [shape: f32[24,256], index: 3, kind: output, shape index: {}]
  %s4 = sld [smem:[#allocation0]]
  $region117: #{normalize_pallas.1} parent=0
    _
  %s6 = ssub.s32 1, %s4
  %s7 = scalar_select 0, %s6, %s4
  $region1: #{normalize_pallas.1} parent=0
    #allocation2 [shape = 'u8[24576]{0}', space=vmem, size = 0x6000, scoped, tag = 'input window, operand 0']
    #allocation3 [shape = 'u8[24576]{0}', space=vmem, size = 0x6000, scoped, tag = 'output window, operand 0']
    loop: start=0, step=1, limit=4
    $region2: #{normalize_pallas.1} parent=1 // loop_pre_header
      _
    $region3: #{normalize_pallas.1} parent=1 // loop_header
      %s9 = sphi 0, %s13
      %p10 = scmp.ge.s32.totalorder %s9, 4
      %s16 = sphi 0, %s28
      %s17 = sphi 0, %s24
      %s18 = sphi 0, %s16
      %s19 = sphi 0, %s17
      %s20 = sphi 0, %s18
      %s21 = sphi 0, %s19
      %s33 = sphi 0, %s35
      %s36 = sphi 0, %s33
      %s37 = sphi 0, %s36
      %s53 = sphi 0, %s37
      %s59 = sphi 0, %s61
      %s62 = sphi 0, %s59
      %s63 = sphi 0, %s62
      %s79 = sphi 0, %s63
      %s85 = sphi 0, %s87
      %s88 = sphi 0, %s85
      %s89 = sphi 0, %s88
      %s105 = sphi 0, %s89
      %s113 = sphi 0, %s115
      %s116 = sphi 0, %s113
      %s117 = sphi 0, %s116
      %s133 = sphi 0, %s117
    $region4: #{normalize_pallas.1} parent=1 // loop_header_branch
      %12 = sbr.rel (%p10) target = $region8
    $region5: #{normalize_pallas.1} parent=1 // loop_body
      %s14 = ssub.s32 %s9, 1
      %s15 = ssub.s32 %s9, 2
      %s22 = sadd.s32 1, %s17
      %p23 = scmp.ge.s32.totalorder %s22, 2
      %s24 = scalar_select %p23, 0, %s22
      %s25 = sadd.s32 1, %s16
      %s26 = scalar_select %p23, %s25, %s16
      %p27 = scmp.ge.s32.totalorder %s26, 1
      %s28 = scalar_select %p27, 0, %s26
      %s29 = ssub.s32 %s16, %s28
      %s30 = ssub.s32 %s17, %s24
      %s31 = sor.u32 %s29, %s30
      %p32 = scmp.eq.s32.totalorder %s31, 0
      %s34 = sadd.s32 %s33, 1
      %s35 = scalar_select %p32, %s33, %s34
      %p38 = pneg %p32
      %p39 = scmp.eq.s32.totalorder %s9, 1
      %p40 = por %p38, %p39
      %p41 = scmp.ne.s32.totalorder %s33, %s36
      %p42 = scmp.eq.s32.totalorder %s9, 0
      %p43 = por %p41, %p42
      %p44 = scmp.ne.s32.totalorder %s33, %s36
      %p45 = scmp.eq.s32.totalorder %s14, 1
      %p46 = por %p44, %p45
      %p47 = scmp.ne.s32.totalorder %s36, %s37
      %p48 = scmp.eq.s32.totalorder %s14, 0
      %p49 = por %p47, %p48
      %p50 = scmp.ne.s32.totalorder %s36, %s37
      %p51 = scmp.eq.s32.totalorder %s15, 1
      %p52 = por %p50, %p51
      %p54 = scmp.ne.s32.totalorder %s37, %s53
      %p55 = scmp.eq.s32.totalorder %s15, 0
      %p56 = por %p54, %p55
      %s57 = ssub.s32 %s16, %s28
      %p58 = scmp.eq.s32.totalorder %s57, 0
      %s60 = sadd.s32 %s59, 1
      %s61 = scalar_select %p58, %s59, %s60
      %p64 = pneg %p58
      %p65 = scmp.eq.s32.totalorder %s9, 1
      %p66 = por %p64, %p65
      %p67 = scmp.ne.s32.totalorder %s59, %s62
      %p68 = scmp.eq.s32.totalorder %s9, 0
      %p69 = por %p67, %p68
      %p70 = scmp.ne.s32.totalorder %s59, %s62
      %p71 = scmp.eq.s32.totalorder %s14, 1
      %p72 = por %p70, %p71
      %p73 = scmp.ne.s32.totalorder %s62, %s63
      %p74 = scmp.eq.s32.totalorder %s14, 0
      %p75 = por %p73, %p74
      %p76 = scmp.ne.s32.totalorder %s62, %s63
      %p77 = scmp.eq.s32.totalorder %s15, 1
      %p78 = por %p76, %p77
      %p80 = scmp.ne.s32.totalorder %s63, %s79
      %p81 = scmp.eq.s32.totalorder %s15, 0
      %p82 = por %p80, %p81
      %s83 = ssub.s32 %s16, %s28
      %p84 = scmp.eq.s32.totalorder %s83, 0
      %s86 = sadd.s32 %s85, 1
      %s87 = scalar_select %p84, %s85, %s86
      %p90 = pneg %p84
      %p91 = scmp.eq.s32.totalorder %s9, 1
      %p92 = por %p90, %p91
      %p93 = scmp.ne.s32.totalorder %s85, %s88
      %p94 = scmp.eq.s32.totalorder %s9, 0
      %p95 = por %p93, %p94
      %p96 = scmp.ne.s32.totalorder %s85, %s88
      %p97 = scmp.eq.s32.totalorder %s14, 1
      %p98 = por %p96, %p97
      %p99 = scmp.ne.s32.totalorder %s88, %s89
      %p100 = scmp.eq.s32.totalorder %s14, 0
      %p101 = por %p99, %p100
      %p102 = scmp.ne.s32.totalorder %s88, %s89
      %p103 = scmp.eq.s32.totalorder %s15, 1
      %p104 = por %p102, %p103
      %p106 = scmp.ne.s32.totalorder %s89, %s105
      %p107 = scmp.eq.s32.totalorder %s15, 0
      %p108 = por %p106, %p107
      %s109 = ssub.s32 %s16, %s28
      %s110 = ssub.s32 %s17, %s24
      %s111 = sor.u32 %s109, %s110
      %p112 = scmp.eq.s32.totalorder %s111, 0
      %s114 = sadd.s32 %s113, 1
      %s115 = scalar_select %p112, %s113, %s114
      %p118 = pneg %p112
      %p119 = scmp.eq.s32.totalorder %s9, 1
      %p120 = por %p118, %p119
      %p121 = scmp.ne.s32.totalorder %s113, %s116
      %p122 = scmp.eq.s32.totalorder %s9, 0
      %p123 = por %p121, %p122
      %p124 = scmp.ne.s32.totalorder %s113, %s116
      %p125 = scmp.eq.s32.totalorder %s14, 1
      %p126 = por %p124, %p125
      %p127 = scmp.ne.s32.totalorder %s116, %s117
      %p128 = scmp.eq.s32.totalorder %s14, 0
      %p129 = por %p127, %p128
      %p130 = scmp.ne.s32.totalorder %s116, %s117
      %p131 = scmp.eq.s32.totalorder %s15, 1
      %p132 = por %p130, %p131
      %p134 = scmp.ne.s32.totalorder %s117, %s133
      %p135 = scmp.eq.s32.totalorder %s15, 0
      %p136 = por %p134, %p135
      %p137 = scmp.le.s32.totalorder 1, %s9
      %p138 = scmp.lt.s32.totalorder %s9, 3
      %p139 = pnand %p137, %p138
      %p140 = pneg %p139
      // Predicated region
      $region9: #{normalize_pallas.1} parent=5 // pred_check
        _
      $region10: #{normalize_pallas.1} parent=5 // pred_check_branch
        %142 = sbr.rel (%p139) target = $region12
      $region11: #{normalize_pallas.1} parent=5 // pred_region
        %s143 = ssub.s32 %s9, 1
        // Predicated region
        $region13: #{normalize_pallas.1} parent=11 // pred_check
          %p144 = pneg %p75
        $region14: #{normalize_pallas.1} parent=11 // pred_check_branch
          %146 = sbr.rel (%p144) target = $region16
        $region15: #{normalize_pallas.1} parent=11 // pred_region
          %s147 = smul.u32 3, %s18
          %p148 = scmp.lt.s32.totalorder %s147, 2
          %s149 = scalar_select %p148, %s147, 2
          %s150 = smul.addr %s149, 8
          %s151 = scalar_lea.vmem %s1, %s150
          %s152 = smul.u32 3, %s18
        $region16: #{normalize_pallas.1} parent=11 // pred_fallthru
          _
        // Predicated region
        $region17: #{normalize_pallas.1} parent=11 // pred_check
          %p153 = pneg %p101
        $region18: #{normalize_pallas.1} parent=11 // pred_check_branch
          %155 = sbr.rel (%p153) target = $region20
        $region19: #{normalize_pallas.1} parent=11 // pred_region
          %s156 = smul.u32 3, %s18
          %p157 = scmp.lt.s32.totalorder %s156, 2
          %s158 = scalar_select %p157, %s156, 2
          %s159 = smul.addr %s158, 8
          %s160 = scalar_lea.vmem %s2, %s159
          %s161 = smul.u32 3, %s18
        $region20: #{normalize_pallas.1} parent=11 // pred_fallthru
          _
      $region12: #{normalize_pallas.1} parent=5 // pred_fallthru
        _
      %p162 = scmp.lt.s32.totalorder %s9, 2
      // Predicated region
      $region21: #{normalize_pallas.1} parent=5 // pred_check
        %p163 = pneg %p162
      $region22: #{normalize_pallas.1} parent=5 // pred_check_branch
        %165 = sbr.rel (%p163) target = $region24
      $region23: #{normalize_pallas.1} parent=5 // pred_region
        // Predicated region
        $region25: #{normalize_pallas.1} parent=23 // pred_check
          %p166 = pneg %p43
        $region26: #{normalize_pallas.1} parent=23 // pred_check_branch
          %168 = sbr.rel (%p166) target = $region28
        $region27: #{normalize_pallas.1} parent=23 // pred_region
          %s169 = sand.u32 %s33, 1
          %s170 = sand.u32 %s33, 1
          %s171 = smul.addr %s170, 24
          %s172 = scalar_lea.vmem [#allocation2], %s171
          %s173 = smul.u32 3, %s16
          %s174 = smul.addr %s173, 2
          %s175 = sadd.s32 %s17, %s174
          %s176 = smul.addr %s175, 8
          %s177 = scalar_lea.vmem %s0, %s176
          // Predicated region
          $region29: #{normalize_pallas.1} parent=27 // pred_check
            _
          $region30: #{normalize_pallas.1} parent=27 // pred_check_branch
            %179 = sbr.rel (0) target = $region32
          $region31: #{normalize_pallas.1} parent=27 // pred_region
            // Predicated region
            $region33: #{normalize_pallas.1} parent=31 // pred_check
              _
            $region34: #{normalize_pallas.1} parent=31 // pred_check_branch
              %181 = sbr.rel (0) target = $region36
            $region35: #{normalize_pallas.1} parent=31 // pred_region
              // Predicated region
              $region48: #{normalize_pallas.1} parent=35 // pred_check
                _
              $region49: #{normalize_pallas.1} parent=35 // pred_check_branch
                %201 = sbr.rel (0) target = $region51
              $region50: #{normalize_pallas.1} parent=35 // pred_region
                loop: start=0, step=1, limit=1
                $region52: #{normalize_pallas.1} parent=50 // loop_pre_header
                  _
                $region53: #{normalize_pallas.1} parent=50 // loop_header
                  %s203 = sphi 0, %s207
                  %p204 = scmp.ge.s32.totalorder %s203, 1
                  %s208 = sphi %s177, %s177
                  %s209 = sphi %s172, %s172
                $region54: #{normalize_pallas.1} parent=50 // loop_header_branch
                  %206 = sbr.rel (%p204) target = $region58
                $region55: #{normalize_pallas.1} parent=50 // loop_body
                  %v210 = vld [vmem:[%s208] sm:$0xff]
                  %211 = vst [vmem:[%s209] sm:$0xff] %v210
                  %v212 = vld [vmem:[%s208 + $0x10] sm:$0xff]
                  %213 = vst [vmem:[%s209 + $0x8] sm:$0xff] %v212
                  %v214 = vld [vmem:[%s208 + $0x20] sm:$0xff]
                  %215 = vst [vmem:[%s209 + $0x10] sm:$0xff] %v214
                $region56: #{normalize_pallas.1} parent=50 // loop_footer
                  %s207 = sadd.s32 1, %s203
                $region57: #{normalize_pallas.1} parent=50 // loop_footer_branch
                  %202 = sbr.rel target = $region53
                $region58: #{normalize_pallas.1} parent=50 // loop_exit
                  _
              $region51: #{normalize_pallas.1} parent=35 // pred_fallthru
                _
              // Predicated region
              $region59: #{normalize_pallas.1} parent=35 // pred_check
                _
              $region60: #{normalize_pallas.1} parent=35 // pred_check_branch
                %217 = sbr.rel target = $region62
              $region61: #{normalize_pallas.1} parent=35 // pred_region
                _
              $region62: #{normalize_pallas.1} parent=35 // pred_fallthru
                _
            $region36: #{normalize_pallas.1} parent=31 // pred_fallthru
              _
            // Predicated region
            $region37: #{normalize_pallas.1} parent=31 // pred_check
              _
            $region38: #{normalize_pallas.1} parent=31 // pred_check_branch
              %183 = sbr.rel target = $region40
            $region39: #{normalize_pallas.1} parent=31 // pred_region
              %s185 = ssub.s32 256, 1
              loop: start=0, step=1, limit=1
              $region41: #{normalize_pallas.1} parent=39 // loop_pre_header
                _
              $region42: #{normalize_pallas.1} parent=39 // loop_header
                %s187 = sphi 0, %s191
                %p188 = scmp.ge.s32.totalorder %s187, 1
                %s192 = sphi %s177, %s177
                %s193 = sphi %s172, %s172
              $region43: #{normalize_pallas.1} parent=39 // loop_header_branch
                %190 = sbr.rel (%p188) target = $region47
              $region44: #{normalize_pallas.1} parent=39 // loop_body
                %v194 = vld [vmem:[%s192] sm:%s185]
                %195 = vst [vmem:[%s193] sm:%s185] %v194
                %v196 = vld [vmem:[%s192 + $0x10] sm:%s185]
                %197 = vst [vmem:[%s193 + $0x8] sm:%s185] %v196
                %v198 = vld [vmem:[%s192 + $0x20] sm:%s185]
                %199 = vst [vmem:[%s193 + $0x10] sm:%s185] %v198
              $region45: #{normalize_pallas.1} parent=39 // loop_footer
                %s191 = sadd.s32 1, %s187
              $region46: #{normalize_pallas.1} parent=39 // loop_footer_branch
                %186 = sbr.rel target = $region42
              $region47: #{normalize_pallas.1} parent=39 // loop_exit
                _
            $region40: #{normalize_pallas.1} parent=31 // pred_fallthru
              _
          $region32: #{normalize_pallas.1} parent=27 // pred_fallthru
            _
          %218 = vnop
        $region28: #{normalize_pallas.1} parent=23 // pred_fallthru
          _
      $region24: #{normalize_pallas.1} parent=5 // pred_fallthru
        _
      %p219 = scmp.le.s32.totalorder 1, %s9
      %p220 = scmp.lt.s32.totalorder %s9, 3
      %p221 = pnand %p219, %p220
      %p222 = pneg %p221
      // Predicated region
      $region63: #{normalize_pallas.1} parent=5 // pred_check
        _
      $region64: #{normalize_pallas.1} parent=5 // pred_check_branch
        %224 = sbr.rel (%p221) target = $region66
      $region65: #{normalize_pallas.1} parent=5 // pred_region
        %s225 = ssub.s32 %s9, 1
        %s226 = sand.u32 %s36, 1
        %s227 = sand.u32 %s36, 1
        %s228 = smul.addr %s227, 24
        %s229 = scalar_lea.vmem [#allocation2], %s228
        // Predicated region
        $region67: #{normalize_pallas.1} parent=65 // pred_check
          %p230 = pneg %p49
        $region68: #{normalize_pallas.1} parent=65 // pred_check_branch
          %232 = sbr.rel (%p230) target = $region70
        $region69: #{normalize_pallas.1} parent=65 // pred_region
          _
        $region70: #{normalize_pallas.1} parent=65 // pred_fallthru
          _
        %s233 = sand.u32 %s36, 1
        %s234 = sand.u32 %s36, 1
        %s235 = smul.addr %s234, 24
        %s236 = scalar_lea.vmem [#allocation2], %s235
        %p237 = pneg %p49
        %p238 = pneg %p46
        %s239 = smul.u32 3, %s18
        %p240 = scmp.lt.s32.totalorder %s239, 2
        %s241 = scalar_select %p240, %s239, 2
        %s242 = smul.addr %s241, 8
        %s243 = scalar_lea.vmem %s1, %s242
        %p244 = pneg %p75
        %p245 = pneg %p72
        %s246 = smul.u32 3, %s18
        %p247 = scmp.lt.s32.totalorder %s246, 2
        %s248 = scalar_select %p247, %s246, 2
        %s249 = smul.addr %s248, 8
        %s250 = scalar_lea.vmem %s2, %s249
        %p251 = pneg %p101
        %p252 = pneg %p98
        %p253 = pneg %p129
        %p254 = pneg %p126
        %s255 = sand.u32 %s116, 1
        %s256 = sand.u32 %s116, 1
        %s257 = smul.addr %s256, 24
        %s258 = scalar_lea.vmem [#allocation3], %s257
        %s259 = smul.u32 3, %s18
        %s260 = smul.u32 3, %s18
        %p261 = scmp.lt.s32.totalorder %s260, 2
        %s262 = scalar_select %p261, %s260, 2
        %s263 = smul.addr %s262, 8
        %s264 = scalar_lea.vmem %s1, %s263
        %s265 = smul.u32 3, %s18
        %s266 = smul.u32 3, %s18
        %p267 = scmp.lt.s32.totalorder %s266, 2
        %s268 = scalar_select %p267, %s266, 2
        %s269 = smul.addr %s268, 8
        %s270 = scalar_lea.vmem %s2, %s269
        %s271 = smul.u32 3, %s18
        %s272 = smul.u32 3, %s18
        %v273 = vld [vmem:[%s229] sm:$0xff]
        %v274 = vld [vmem:[%s229 + $0x8] sm:$0xff]
        %v275 = vld [vmem:[%s229 + $0x10] sm:$0xff]
        %v276 = vld [vmem:[%s264] sm:$0xff]
        %v277 = vld [vmem:[%s264 + $0x8] sm:$0xff]
        %v278 = vld [vmem:[%s264 + $0x10] sm:$0xff]
        %280 = vset.pattern.permute.xlu0 0
        %281 = vperm.xlu0 %280, %v276
        %v282 = vpop.permute.xlu0 %281
        %285 = vset.pattern.permute.xlu0 0
        %286 = vperm.xlu0 %285, %v277
        %v287 = vpop.permute.xlu0 %286
        %290 = vset.pattern.permute.xlu0 0
        %291 = vperm.xlu0 %290, %v278
        %v292 = vpop.permute.xlu0 %291
        %v294 = vmul.f32 %v273, %v282
        %v295 = vmul.f32 %v274, %v287
        %v296 = vmul.f32 %v275, %v292
        %v297 = vld [vmem:[%s270] sm:$0xff]
        %v298 = vld [vmem:[%s270 + $0x8] sm:$0xff]
        %v299 = vld [vmem:[%s270 + $0x10] sm:$0xff]
        %301 = vset.pattern.permute.xlu0 0
        %302 = vperm.xlu0 %301, %v297
        %v303 = vpop.permute.xlu0 %302
        %306 = vset.pattern.permute.xlu0 0
        %307 = vperm.xlu0 %306, %v298
        %v308 = vpop.permute.xlu0 %307
        %311 = vset.pattern.permute.xlu0 0
        %312 = vperm.xlu0 %311, %v299
        %v313 = vpop.permute.xlu0 %312
        %v315 = vadd.f32 %v294, %v303
        %v316 = vadd.f32 %v295, %v308
        %v317 = vadd.f32 %v296, %v313
        %318 = vst [vmem:[%s258] sm:$0xff] %v315
        %319 = vst [vmem:[%s258 + $0x8] sm:$0xff] %v316
        %320 = vst [vmem:[%s258 + $0x10] sm:$0xff] %v317
        %s321 = sand.u32 %s116, 1
        %s322 = sand.u32 %s116, 1
        %s323 = smul.addr %s322, 24
        %s324 = scalar_lea.vmem [#allocation3], %s323
        // Predicated region
        $region71: #{normalize_pallas.1} parent=65 // pred_check
          %p325 = pneg %p126
        $region72: #{normalize_pallas.1} parent=65 // pred_check_branch
          %327 = sbr.rel (%p325) target = $region74
        $region73: #{normalize_pallas.1} parent=65 // pred_region
          %s328 = smul.u32 3, %s18
          %s329 = smul.addr %s328, 2
          %s330 = sadd.s32 %s19, %s329
          %s331 = smul.addr %s330, 8
          %s332 = scalar_lea.vmem %s3, %s331
          // Predicated region
          $region75: #{normalize_pallas.1} parent=73 // pred_check
            _
          $region76: #{normalize_pallas.1} parent=73 // pred_check_branch
            %334 = sbr.rel (0) target = $region78
          $region77: #{normalize_pallas.1} parent=73 // pred_region
            // Predicated region
            $region79: #{normalize_pallas.1} parent=77 // pred_check
              _
            $region80: #{normalize_pallas.1} parent=77 // pred_check_branch
              %336 = sbr.rel (0) target = $region82
            $region81: #{normalize_pallas.1} parent=77 // pred_region
              // Predicated region
              $region94: #{normalize_pallas.1} parent=81 // pred_check
                _
              $region95: #{normalize_pallas.1} parent=81 // pred_check_branch
                %356 = sbr.rel (0) target = $region97
              $region96: #{normalize_pallas.1} parent=81 // pred_region
                loop: start=0, step=1, limit=1
                $region98: #{normalize_pallas.1} parent=96 // loop_pre_header
                  _
                $region99: #{normalize_pallas.1} parent=96 // loop_header
                  %s358 = sphi 0, %s362
                  %p359 = scmp.ge.s32.totalorder %s358, 1
                  %s363 = sphi %s324, %s324
                  %s364 = sphi %s332, %s332
                $region100: #{normalize_pallas.1} parent=96 // loop_header_branch
                  %361 = sbr.rel (%p359) target = $region104
                $region101: #{normalize_pallas.1} parent=96 // loop_body
                  %v365 = vld [vmem:[%s363] sm:$0xff]
                  %366 = vst [vmem:[%s364] sm:$0xff] %v365
                  %v367 = vld [vmem:[%s363 + $0x8] sm:$0xff]
                  %368 = vst [vmem:[%s364 + $0x10] sm:$0xff] %v367
                  %v369 = vld [vmem:[%s363 + $0x10] sm:$0xff]
                  %370 = vst [vmem:[%s364 + $0x20] sm:$0xff] %v369
                $region102: #{normalize_pallas.1} parent=96 // loop_footer
                  %s362 = sadd.s32 1, %s358
                $region103: #{normalize_pallas.1} parent=96 // loop_footer_branch
                  %357 = sbr.rel target = $region99
                $region104: #{normalize_pallas.1} parent=96 // loop_exit
                  _
              $region97: #{normalize_pallas.1} parent=81 // pred_fallthru
                _
              // Predicated region
              $region105: #{normalize_pallas.1} parent=81 // pred_check
                _
              $region106: #{normalize_pallas.1} parent=81 // pred_check_branch
                %372 = sbr.rel target = $region108
              $region107: #{normalize_pallas.1} parent=81 // pred_region
                _
              $region108: #{normalize_pallas.1} parent=81 // pred_fallthru
                _
            $region82: #{normalize_pallas.1} parent=77 // pred_fallthru
              _
            // Predicated region
            $region83: #{normalize_pallas.1} parent=77 // pred_check
              _
            $region84: #{normalize_pallas.1} parent=77 // pred_check_branch
              %338 = sbr.rel target = $region86
            $region85: #{normalize_pallas.1} parent=77 // pred_region
              %s340 = ssub.s32 256, 1
              loop: start=0, step=1, limit=1
              $region87: #{normalize_pallas.1} parent=85 // loop_pre_header
                _
              $region88: #{normalize_pallas.1} parent=85 // loop_header
                %s342 = sphi 0, %s346
                %p343 = scmp.ge.s32.totalorder %s342, 1
                %s347 = sphi %s324, %s324
                %s348 = sphi %s332, %s332
              $region89: #{normalize_pallas.1} parent=85 // loop_header_branch
                %345 = sbr.rel (%p343) target = $region93
              $region90: #{normalize_pallas.1} parent=85 // loop_body
                %v349 = vld [vmem:[%s347] sm:%s340]
                %350 = vst [vmem:[%s348] sm:%s340] %v349
                %v351 = vld [vmem:[%s347 + $0x8] sm:%s340]
                %352 = vst [vmem:[%s348 + $0x10] sm:%s340] %v351
                %v353 = vld [vmem:[%s347 + $0x10] sm:%s340]
                %354 = vst [vmem:[%s348 + $0x20] sm:%s340] %v353
              $region91: #{normalize_pallas.1} parent=85 // loop_footer
                %s346 = sadd.s32 1, %s342
              $region92: #{normalize_pallas.1} parent=85 // loop_footer_branch
                %341 = sbr.rel target = $region88
              $region93: #{normalize_pallas.1} parent=85 // loop_exit
                _
            $region86: #{normalize_pallas.1} parent=77 // pred_fallthru
              _
          $region78: #{normalize_pallas.1} parent=73 // pred_fallthru
            _
          %373 = vnop
        $region74: #{normalize_pallas.1} parent=65 // pred_fallthru
          _
      $region66: #{normalize_pallas.1} parent=5 // pred_fallthru
        _
      %p374 = scmp.le.s32.totalorder 2, %s9
      // Predicated region
      $region109: #{normalize_pallas.1} parent=5 // pred_check
        %p375 = pneg %p374
      $region110: #{normalize_pallas.1} parent=5 // pred_check_branch
        %377 = sbr.rel (%p375) target = $region112
      $region111: #{normalize_pallas.1} parent=5 // pred_region
        %s378 = ssub.s32 %s9, 2
        // Predicated region
        $region113: #{normalize_pallas.1} parent=111 // pred_check
          %p379 = pneg %p132
        $region114: #{normalize_pallas.1} parent=111 // pred_check_branch
          %381 = sbr.rel (%p379) target = $region116
        $region115: #{normalize_pallas.1} parent=111 // pred_region
          %s382 = sand.u32 %s117, 1
          %s383 = sand.u32 %s117, 1
          %s384 = smul.addr %s383, 24
          %s385 = scalar_lea.vmem [#allocation3], %s384
        $region116: #{normalize_pallas.1} parent=111 // pred_fallthru
          _
      $region112: #{normalize_pallas.1} parent=5 // pred_fallthru
        _
    $region6: #{normalize_pallas.1} parent=1 // loop_footer
      %s13 = sadd.s32 1, %s9
    $region7: #{normalize_pallas.1} parent=1 // loop_footer_branch
      %8 = sbr.rel target = $region3
    $region8: #{normalize_pallas.1} parent=1 // loop_exit
      _

</llo_original>
